<compile_context>
chip_gen: v5e
topology: v5e:2x2
jax: 0.10.0
libtpu: 0.0.40
codegen_flags: <defaults>
</compile_context>

<pallas_src>
import functools

import jax
import jax.numpy as jnp
from jax.experimental import pallas as pl
from jax.experimental.pallas import tpu as pltpu

_LANES = 128
_SUBLANES = 8
_MAX_TILE_ROWS = 2048     # (2048, 128) f32 block = 1 MiB per f32 input stream


def _default_num_splits():
    """2-way 'parallel' grid split only pays off on chips with 2 TensorCores
    (v7x / megacore v4 / v5p); on single-TC v5e / v6e it just duplicates the
    accumulator outputs and init steps, so default to 1 there."""
    try:
        kind = jax.devices()[0].device_kind.lower()
    except Exception:
        return 1
    return 2 if any(tag in kind for tag in ("v7", "v4", "v5p")) else 1


# ----------------------------------------------------------------------------
# Shared Sobel stencil (fixed fx / fy 3x3 filters, exactly as GradLoss.imgrad).
# ----------------------------------------------------------------------------
def _sobel_gyx(p, H, W):
    """p: (H+2, W+2) zero-padded image.  Returns (gy, gx), each (H, W)."""
    # TODO(synk): express the +-1 column taps with pltpu.roll on a lane-aligned
    # (W padded to 128) tile so the shifts ride the XLU slot instead of
    # materializing lane-offset slices; kept as proven static slices here.
    tl = p[0:H, 0:W]
    tc = p[0:H, 1:W + 1]
    tr = p[0:H, 2:W + 2]
    ml = p[1:H + 1, 0:W]
    mr = p[1:H + 1, 2:W + 2]
    bl = p[2:H + 2, 0:W]
    bc = p[2:H + 2, 1:W + 1]
    br = p[2:H + 2, 2:W + 2]
    # fx = [[1, 0, -1], [2, 0, -2], [1, 0, -1]]
    gx = (tl - tr) + 2.0 * (ml - mr) + (bl - br)
    # fy = [[1, 2, 1], [0, 0, 0], [-1, -2, -1]]
    gy = (tl + tr) - (bl + br) + 2.0 * (tc - bc)
    return gy, gx


# ----------------------------------------------------------------------------
# Standalone Sobel kernel (imgrad_yx helper -- used to build example inputs).
# ----------------------------------------------------------------------------
def _sobel_kernel(p_ref, o_ref):
    H, W = o_ref.shape[2], o_ref.shape[3]
    gy, gx = _sobel_gyx(p_ref[0], H, W)
    o_ref[0, 0] = gy
    o_ref[0, 1] = gx


def imgrad_yx(img):
    """img: (N, C, H, W) float (NCHW).  Returns (N, 2C, H*W//C) like torch."""
    N, C, H, W = img.shape
    assert (H * W) % C == 0, "torch .view(N, C, -1) requires H*W % C == 0"
    mean_img = jnp.mean(img.astype(jnp.float32), axis=1)   # (N, H, W)      glue
    padded = jnp.pad(mean_img, ((0, 0), (1, 1), (1, 1)))   # (N, H+2, W+2)  glue

    # TODO(synk): for large images tile H with a 2-row halo (v5e 16 MiB / v7x
    # 32 MiB scoped-VMEM budgets) and use a lane-dense packed output; at these
    # sizes whole-image blocks are fine and grad_loss_fused avoids
    # materializing the gradients entirely.
    g = pl.pallas_call(
        _sobel_kernel,
        out_shape=jax.ShapeDtypeStruct((N, 2, H, W), jnp.float32),
        grid=(N,),
        in_specs=[pl.BlockSpec((1, H + 2, W + 2), lambda n: (n, 0, 0))],
        out_specs=pl.BlockSpec((1, 2, H, W), lambda n: (n, 0, 0, 0)),
        compiler_params=pltpu.CompilerParams(
            dimension_semantics=("parallel",)),
    )(padded)

    # gy occupies the first H*W elements of each image, gx the next H*W, so a
    # contiguous reshape reproduces torch.cat((gy.view(N,C,-1),
    # gx.view(N,C,-1)), dim=1) without an extra concatenate copy.
    return g.reshape(N, 2 * C, (H * W) // C)


# ----------------------------------------------------------------------------
# Forward loss kernel: masked mean of |grad_real - grad_fake|.
# ----------------------------------------------------------------------------
def _masked_mean_kernel(f_ref, r_ref, m_ref, sum_ref, cnt_ref, *,
                        rows_valid, tiles_per_split):
    p = pl.program_id(0)          # parallel split (megacore on v7x)
    t = pl.program_id(1)          # arbitrary reduction axis

    # The small (8, 128) output blocks are revisited across t -> accumulators.
    @pl.when(t == 0)
    def _():
        sum_ref[...] = jnp.zeros_like(sum_ref)
        cnt_ref[...] = jnp.zeros_like(cnt_ref)

    tile_rows = f_ref.shape[0]
    gtile = p * tiles_per_split + t                   # intended (unclamped) tile
    row0 = gtile * tile_rows
    row_ids = row0 + jax.lax.broadcasted_iota(jnp.int32, (tile_rows, _LANES), 0)
    # Row mask handles ragged-tail / overshoot tiles; garbage OOB data never
    # contributes because jnp.where selects 0 there (no NaN*0 hazard).
    valid = (row_ids < rows_valid) & (m_ref[...] != 0)

    d = jnp.where(valid, jnp.abs(r_ref[...] - f_ref[...]), 0.0)
    c = valid.astype(jnp.int32)
    # Leading-axis sum over (tile_rows//8, 8, 128) = pure VPU vreg adds into a
    # single-vreg accumulator; the one cross-lane reduce happens once, in JAX,
    # on the tiny per-split outputs after the kernel.
    sum_ref[...] += jnp.sum(d.reshape(-1, _SUBLANES, _LANES), axis=0)
    cnt_ref[...] += jnp.sum(c.reshape(-1, _SUBLANES, _LANES), axis=0)


def grad_loss(grad_fake, grad_real, valid_mask, *, num_splits=None):
    """Equivalent of GradLoss.forward.  Returns a scalar float32."""
    if num_splits is None:
        num_splits = _default_num_splits()

    total = grad_fake.size
    # TODO(synk): optionally stream f/r as bf16 (~1.8x less HBM traffic) with
    # f32 in-kernel accumulation -- numerics tradeoff, kept f32 to match torch.
    f = grad_fake.reshape(-1).astype(jnp.float32)
    r = grad_real.reshape(-1).astype(jnp.float32)
    m = valid_mask.reshape(-1).astype(jnp.int8)       # 1-byte mask stream

    # Pad only to an (8, 128) boundary so the in-kernel (rows//8, 8, 128)
    # regroup is exact; padded mask entries are 0 so they never contribute.
    chunk = _SUBLANES * _LANES
    rem = total % chunk
    if rem:
        pad = chunk - rem
        f = jnp.pad(f, (0, pad))
        r = jnp.pad(r, (0, pad))
        m = jnp.pad(m, (0, pad))
    rows = f.shape[0] // _LANES
    f = f.reshape(rows, _LANES)
    r = r.reshape(rows, _LANES)
    m = m.reshape(rows, _LANES)

    tile_rows = rows if rows <= _MAX_TILE_ROWS else _MAX_TILE_ROWS
    n_tiles = -(-rows // tile_rows)
    num_splits = max(1, min(num_splits, n_tiles))
    tiles_per_split = -(-n_tiles // num_splits)

    # Clamp the block index for overshoot tiles; their contribution is masked
    # out in-kernel via the intended (unclamped) tile id.
    in_map = lambda p, t: (jnp.minimum(p * tiles_per_split + t, n_tiles - 1), 0)
    out_map = lambda p, t: (p, 0, 0)

    kernel = functools.partial(_masked_mean_kernel,
                               rows_valid=rows,
                               tiles_per_split=tiles_per_split)

    sums, cnts = pl.pallas_call(
        kernel,
        out_shape=(jax.ShapeDtypeStruct((num_splits, _SUBLANES, _LANES),
                                        jnp.float32),
                   jax.ShapeDtypeStruct((num_splits, _SUBLANES, _LANES),
                                        jnp.int32)),
        grid=(num_splits, tiles_per_split),
        in_specs=[pl.BlockSpec((tile_rows, _LANES), in_map),
                  pl.BlockSpec((tile_rows, _LANES), in_map),
                  pl.BlockSpec((tile_rows, _LANES), in_map)],
        out_specs=(pl.BlockSpec((None, _SUBLANES, _LANES), out_map),
                   pl.BlockSpec((None, _SUBLANES, _LANES), out_map)),
        compiler_params=pltpu.CompilerParams(
            dimension_semantics=("parallel", "arbitrary")),
    )(f, r, m)

    # Tiny final combine (and the divide) stay in JAX so the parallel split
    # across TensorCores remains correct.  NaN for an empty mask, like torch.
    return jnp.sum(sums) / jnp.sum(cnts).astype(jnp.float32)


# ----------------------------------------------------------------------------
# Fused pipeline: Sobel(fake) + Sobel(real) + |diff| + masked mean, one kernel.
# Gradient tensors never round-trip through HBM.
# ----------------------------------------------------------------------------
def _fused_loss_kernel(pf_ref, pr_ref, m_ref, sum_ref, cnt_ref, acc_s, acc_c, *,
                       n_imgs, imgs_per_split):
    p = pl.program_id(0)          # parallel split (megacore on v7x)
    t = pl.program_id(1)          # arbitrary batch-reduction axis

    @pl.when(t == 0)
    def _():
        acc_s[...] = jnp.zeros_like(acc_s)
        acc_c[...] = jnp.zeros_like(acc_c)

    b = p * imgs_per_split + t    # intended (unclamped) image id

    @pl.when(b < n_imgs)
    def _():
        H, W = acc_s.shape
        gy_f, gx_f = _sobel_gyx(pf_ref[0], H, W)
        gy_r, gx_r = _sobel_gyx(pr_ref[0], H, W)
        m = m_ref[0]
        my = m[0] != 0
        mx = m[1] != 0
        # Pure-VPU vector accumulation; no per-step XLU-to-scalar / SMEM RMW.
        acc_s[...] += (jnp.where(my, jnp.abs(gy_r - gy_f), 0.0)
                       + jnp.where(mx, jnp.abs(gx_r - gx_f), 0.0))
        acc_c[...] += (jnp.where(my, 1.0, 0.0) + jnp.where(mx, 1.0, 0.0))

    # Single cross-lane reduce in the epilogue, written to a (1, 1) output.
    @pl.when(t == pl.num_programs(1) - 1)
    def _():
        sum_ref[...] = jnp.sum(acc_s[...], axis=(0, 1), keepdims=True)
        cnt_ref[...] = jnp.sum(acc_c[...], axis=(0, 1), keepdims=True)


def grad_loss_fused(fake_img, real_img, valid_mask, *, num_splits=None):
    """== grad_loss(imgrad_yx(fake_img), imgrad_yx(real_img), valid_mask),
    but the gradient tensors never touch HBM."""
    if num_splits is None:
        num_splits = _default_num_splits()
    N, C, H, W = fake_img.shape
    assert (H * W) % C == 0

    # TODO(synk): move the channel-mean and 1-pixel zero-pad into the kernel
    # (NCHW blocks + edge-masked roll taps) and tile H with a 2-row halo so
    # large images fit v5e/v7x scoped VMEM; kept in the wrapper here as the
    # proven-lowering path for the demo shapes.
    pf = jnp.pad(jnp.mean(fake_img.astype(jnp.float32), axis=1),
                 ((0, 0), (1, 1), (1, 1)))
    pr = jnp.pad(jnp.mean(real_img.astype(jnp.float32), axis=1),
                 ((0, 0), (1, 1), (1, 1)))
    # valid_mask is (N, 2C, H*W//C): first C channels mask grad_y, last C grad_x.
    m = valid_mask.reshape(N, 2, H, W).astype(jnp.int8)

    num_splits = max(1, min(num_splits, N))
    imgs_per_split = -(-N // num_splits)

    img_map = lambda p, t: (jnp.minimum(p * imgs_per_split + t, N - 1), 0, 0)
    msk_map = lambda p, t: (jnp.minimum(p * imgs_per_split + t, N - 1), 0, 0, 0)
    out_map = lambda p, t: (p, 0, 0)

    kernel = functools.partial(_fused_loss_kernel, n_imgs=N,
                               imgs_per_split=imgs_per_split)

    sums, cnts = pl.pallas_call(
        kernel,
        out_shape=(jax.ShapeDtypeStruct((num_splits, 1, 1), jnp.float32),
                   jax.ShapeDtypeStruct((num_splits, 1, 1), jnp.float32)),
        grid=(num_splits, imgs_per_split),
        in_specs=[pl.BlockSpec((1, H + 2, W + 2), img_map),
                  pl.BlockSpec((1, H + 2, W + 2), img_map),
                  pl.BlockSpec((1, 2, H, W), msk_map)],
        out_specs=(pl.BlockSpec((None, 1, 1), out_map),
                   pl.BlockSpec((None, 1, 1), out_map)),
        scratch_shapes=[pltpu.VMEM((H, W), jnp.float32),
                        pltpu.VMEM((H, W), jnp.float32)],
        compiler_params=pltpu.CompilerParams(
            dimension_semantics=("parallel", "arbitrary")),
    )(pf, pr, m)

    return jnp.sum(sums) / jnp.sum(cnts)


# ----------------------------------------------------------------------------
# Pure-JAX reference (for correctness check only).
# ----------------------------------------------------------------------------
def _ref_imgrad_yx(img):
    N, C, H, W = img.shape
    m = jnp.mean(img, axis=1, keepdims=True)
    p = jnp.pad(m, ((0, 0), (0, 0), (1, 1), (1, 1)))
    fx = jnp.array([[1, 0, -1], [2, 0, -2], [1, 0, -1]], jnp.float32)
    fy = jnp.array([[1, 2, 1], [0, 0, 0], [-1, -2, -1]], jnp.float32)
    dn = ("NCHW", "OIHW", "NCHW")
    gx = jax.lax.conv_general_dilated(p, fx[None, None], (1, 1), "VALID",
                                      dimension_numbers=dn)
    gy = jax.lax.conv_general_dilated(p, fy[None, None], (1, 1), "VALID",
                                      dimension_numbers=dn)
    return jnp.concatenate((gy.reshape(N, C, -1), gx.reshape(N, C, -1)), axis=1)


if __name__ == "__main__":
    key = jax.random.PRNGKey(0)
    k1, k2, k3 = jax.random.split(key, 3)

    N, C, H, W = 2, 4, 16, 16
    fake_img = jax.random.normal(k1, (N, C, H, W), jnp.float32)
    real_img = jax.random.normal(k2, (N, C, H, W), jnp.float32)

    grad_fake = imgrad_yx(fake_img)                       # (2, 8, 64)
    grad_real = imgrad_yx(real_img)                       # (2, 8, 64)
    valid_mask = jax.random.bernoulli(k3, 0.7, grad_fake.shape)

    loss = grad_loss(grad_fake, grad_real, valid_mask)             # forward()
    loss_fused = grad_loss_fused(fake_img, real_img, valid_mask)   # fused path
    loss = jax.block_until_ready(loss)
    loss_fused = jax.block_until_ready(loss_fused)

    # reference check
    gf_ref = _ref_imgrad_yx(fake_img)
    gr_ref = _ref_imgrad_yx(real_img)
    diff = jnp.abs(gr_ref - gf_ref)
    ref_loss = jnp.sum(jnp.where(valid_mask, diff, 0.0)) / jnp.sum(valid_mask)

    assert jnp.allclose(grad_fake, gf_ref, rtol=1e-5, atol=1e-5)
    assert jnp.allclose(grad_real, gr_ref, rtol=1e-5, atol=1e-5)
    assert jnp.allclose(loss, ref_loss, rtol=1e-5, atol=1e-5), (loss, ref_loss)
    assert jnp.allclose(loss_fused, ref_loss, rtol=1e-5, atol=1e-5), (
        loss_fused, ref_loss)

    print("KERNEL_OK")
</pallas_src>

<mosaic_0001>
module attributes {stable_mosaic.version = 11 : i64} {
  func.func @_sobel_kernel(%arg0: i32, %arg1: memref<1x18x18xf32, #tpu.memory_space<vmem>>, %arg2: memref<1x2x16x16xf32, #tpu.memory_space<vmem>>) attributes {dimension_semantics = [#tpu.dimension_semantics<parallel>], iteration_bounds = array<i64: 2>, scalar_prefetch = 0 : i64, scratch_operands = 0 : i64, tpu.core_type = #tpu.core_type<tc>, window_params = [{transform_indices = @transform_0, window_bounds = array<i64: 1, 18, 18>}, {transform_indices = @transform_1, window_bounds = array<i64: 1, 2, 16, 16>}]} {
    %c0 = arith.constant 0 : index
    %c0_0 = arith.constant 0 : index
    %c0_1 = arith.constant 0 : index
    %0 = vector.load %arg1[%c0, %c0_0, %c0_1] : memref<1x18x18xf32, #tpu.memory_space<vmem>>, vector<1x18x18xf32>
    %1 = vector.shape_cast %0 : vector<1x18x18xf32> to vector<18x18xf32>
    %2 = vector.extract_strided_slice %1 {offsets = [0, 0], sizes = [16, 16], strides = [1, 1]} : vector<18x18xf32> to vector<16x16xf32>
    %3 = vector.extract_strided_slice %1 {offsets = [0, 1], sizes = [16, 16], strides = [1, 1]} : vector<18x18xf32> to vector<16x16xf32>
    %4 = vector.extract_strided_slice %1 {offsets = [0, 2], sizes = [16, 16], strides = [1, 1]} : vector<18x18xf32> to vector<16x16xf32>
    %5 = vector.extract_strided_slice %1 {offsets = [1, 0], sizes = [16, 16], strides = [1, 1]} : vector<18x18xf32> to vector<16x16xf32>
    %6 = vector.extract_strided_slice %1 {offsets = [1, 2], sizes = [16, 16], strides = [1, 1]} : vector<18x18xf32> to vector<16x16xf32>
    %7 = vector.extract_strided_slice %1 {offsets = [2, 0], sizes = [16, 16], strides = [1, 1]} : vector<18x18xf32> to vector<16x16xf32>
    %8 = vector.extract_strided_slice %1 {offsets = [2, 1], sizes = [16, 16], strides = [1, 1]} : vector<18x18xf32> to vector<16x16xf32>
    %9 = vector.extract_strided_slice %1 {offsets = [2, 2], sizes = [16, 16], strides = [1, 1]} : vector<18x18xf32> to vector<16x16xf32>
    %10 = arith.subf %2, %4 : vector<16x16xf32>
    %11 = arith.subf %5, %6 : vector<16x16xf32>
    %cst = arith.constant 2.000000e+00 : f32
    %12 = vector.broadcast %cst : f32 to vector<16x16xf32>
    %13 = arith.mulf %12, %11 : vector<16x16xf32>
    %14 = arith.addf %10, %13 : vector<16x16xf32>
    %15 = arith.subf %7, %9 : vector<16x16xf32>
    %16 = arith.addf %14, %15 : vector<16x16xf32>
    %17 = arith.addf %2, %4 : vector<16x16xf32>
    %18 = arith.addf %7, %9 : vector<16x16xf32>
    %19 = arith.subf %17, %18 : vector<16x16xf32>
    %20 = arith.subf %3, %8 : vector<16x16xf32>
    %cst_2 = arith.constant 2.000000e+00 : f32
    %21 = vector.broadcast %cst_2 : f32 to vector<16x16xf32>
    %22 = arith.mulf %21, %20 : vector<16x16xf32>
    %23 = arith.addf %19, %22 : vector<16x16xf32>
    %c0_3 = arith.constant 0 : index
    %c0_4 = arith.constant 0 : index
    %c0_5 = arith.constant 0 : index
    %c0_6 = arith.constant 0 : index
    %24 = vector.load %arg2[%c0_3, %c0_4, %c0_5, %c0_6] : memref<1x2x16x16xf32, #tpu.memory_space<vmem>>, vector<1x1x16x16xf32>
    %25 = vector.shape_cast %24 : vector<1x1x16x16xf32> to vector<16x16xf32>
    %26 = vector.shape_cast %23 : vector<16x16xf32> to vector<1x1x16x16xf32>
    tpu.vector_store %arg2[%c0_3, %c0_4, %c0_5, %c0_6], %26 {strides = array<i32>} : memref<1x2x16x16xf32, #tpu.memory_space<vmem>>, vector<1x1x16x16xf32>,
    %c0_7 = arith.constant 0 : index
    %c1 = arith.constant 1 : index
    %c0_8 = arith.constant 0 : index
    %c0_9 = arith.constant 0 : index
    %27 = vector.load %arg2[%c0_7, %c1, %c0_8, %c0_9] : memref<1x2x16x16xf32, #tpu.memory_space<vmem>>, vector<1x1x16x16xf32>
    %28 = vector.shape_cast %27 : vector<1x1x16x16xf32> to vector<16x16xf32>
    %29 = vector.shape_cast %16 : vector<16x16xf32> to vector<1x1x16x16xf32>
    tpu.vector_store %arg2[%c0_7, %c1, %c0_8, %c0_9], %29 {strides = array<i32>} : memref<1x2x16x16xf32, #tpu.memory_space<vmem>>, vector<1x1x16x16xf32>,
    return
  }
  func.func @transform_0(%arg0: i32) -> (i32, i32, i32) {
    %c0_i32 = arith.constant 0 : i32
    %c0_i32_0 = arith.constant 0 : i32
    %c0_i32_1 = arith.constant 0 : i32
    return %arg0, %c0_i32, %c0_i32_0 : i32, i32, i32
  }
  func.func @transform_1(%arg0: i32) -> (i32, i32, i32, i32) {
    %c0_i32 = arith.constant 0 : i32
    %c0_i32_0 = arith.constant 0 : i32
    %c0_i32_1 = arith.constant 0 : i32
    %c0_i32_2 = arith.constant 0 : i32
    return %arg0, %c0_i32, %c0_i32_0, %c0_i32_1 : i32, i32, i32, i32
  }
}

</mosaic_0001>

<llo_original>
// kernel: tpu_custom_call.1
$region0: #{tpu_custom_call.1}
  #allocation0 [shape = 'u32[]', space=smem, size = 0x4, offset = 0x4, fixed_abs, tag = 'smem constant byte address 0x4 - core index']
  #allocation1 [shape = 'u32[72,128]{1,0:T(1,128)}', space=vmem, size = 0x9000, scoped, tag = 'internal scratch']
  %s0 = inlined_call_operand.vmem [shape: f32[2,18,18], index: 0, kind: input, shape index: {}]
  %s1 = inlined_call_operand.hbm [shape: f32[2,2,16,16], index: 1, kind: output, shape index: {}]
  %s2 = sld [smem:[#allocation0]]
  $region37: #{tpu_custom_call.1} parent=0
    _
  %s4 = ssub.s32 1, %s2
  %s5 = scalar_select 0, %s4, %s2
  $region1: #{tpu_custom_call.1} parent=0
    #allocation2 [shape = 'u8[32768]{0}', space=vmem, size = 0x8000, scoped, tag = 'output window, operand 0']
    #allocation3 [shape = 's32[2]{0}', space=sflag, size = 0x8, scoped, tag = 'scoped memory for tpu_custom_call.1']
    %6 = vsyncpa [#allocation3], 0
    %s7 = scalar_lea.sflag [#allocation3], 1
    %8 = vsyncpa %s7, 0
    loop: start=0, step=1, limit=4
    $region2: #{tpu_custom_call.1} parent=1 // loop_pre_header
      _
    $region3: #{tpu_custom_call.1} parent=1 // loop_header
      %s10 = sphi 0, %s14
      %p11 = scmp.ge.s32.totalorder %s10, 4
      %s20 = sphi 0, %s22
      %s23 = sphi 0, %s20
      %s24 = sphi 0, %s23
      %s40 = sphi 0, %s24
      %s46 = sphi 0, %s48
      %s49 = sphi 0, %s46
      %s50 = sphi 0, %s49
      %s66 = sphi 0, %s50
    $region4: #{tpu_custom_call.1} parent=1 // loop_header_branch
      %13 = sbr.rel (%p11) target = $region8
    $region5: #{tpu_custom_call.1} parent=1 // loop_body
      %s15 = ssub.s32 %s10, 1
      %s16 = ssub.s32 %s10, 2
      %s17 = sadd.s32 %s10, 1
      %s18 = ssub.s32 %s10, %s17
      %p19 = scmp.eq.s32.totalorder %s18, 0
      %s21 = sadd.s32 %s20, 1
      %s22 = scalar_select %p19, %s20, %s21
      %p25 = pneg %p19
      %p26 = scmp.eq.s32.totalorder %s10, 1
      %p27 = por %p25, %p26
      %p28 = scmp.ne.s32.totalorder %s20, %s23
      %p29 = scmp.eq.s32.totalorder %s10, 0
      %p30 = por %p28, %p29
      %p31 = scmp.ne.s32.totalorder %s20, %s23
      %p32 = scmp.eq.s32.totalorder %s15, 1
      %p33 = por %p31, %p32
      %p34 = scmp.ne.s32.totalorder %s23, %s24
      %p35 = scmp.eq.s32.totalorder %s15, 0
      %p36 = por %p34, %p35
      %p37 = scmp.ne.s32.totalorder %s23, %s24
      %p38 = scmp.eq.s32.totalorder %s16, 1
      %p39 = por %p37, %p38
      %p41 = scmp.ne.s32.totalorder %s24, %s40
      %p42 = scmp.eq.s32.totalorder %s16, 0
      %p43 = por %p41, %p42
      %s44 = ssub.s32 %s10, %s17
      %p45 = scmp.eq.s32.totalorder %s44, 0
      %s47 = sadd.s32 %s46, 1
      %s48 = scalar_select %p45, %s46, %s47
      %p51 = pneg %p45
      %p52 = scmp.eq.s32.totalorder %s10, 1
      %p53 = por %p51, %p52
      %p54 = scmp.ne.s32.totalorder %s46, %s49
      %p55 = scmp.eq.s32.totalorder %s10, 0
      %p56 = por %p54, %p55
      %p57 = scmp.ne.s32.totalorder %s46, %s49
      %p58 = scmp.eq.s32.totalorder %s15, 1
      %p59 = por %p57, %p58
      %p60 = scmp.ne.s32.totalorder %s49, %s50
      %p61 = scmp.eq.s32.totalorder %s15, 0
      %p62 = por %p60, %p61
      %p63 = scmp.ne.s32.totalorder %s49, %s50
      %p64 = scmp.eq.s32.totalorder %s16, 1
      %p65 = por %p63, %p64
      %p67 = scmp.ne.s32.totalorder %s50, %s66
      %p68 = scmp.eq.s32.totalorder %s16, 0
      %p69 = por %p67, %p68
      %p70 = scmp.le.s32.totalorder 1, %s10
      %p71 = scmp.lt.s32.totalorder %s10, 3
      %p72 = pnand %p70, %p71
      %p73 = pneg %p72
      // Predicated region
      $region9: #{tpu_custom_call.1} parent=5 // pred_check
        _
      $region10: #{tpu_custom_call.1} parent=5 // pred_check_branch
        %75 = sbr.rel (%p72) target = $region12
      $region11: #{tpu_custom_call.1} parent=5 // pred_region
        %s76 = ssub.s32 %s10, 1
      $region12: #{tpu_custom_call.1} parent=5 // pred_fallthru
        _
      %p77 = scmp.lt.s32.totalorder %s10, 2
      // Predicated region
      $region13: #{tpu_custom_call.1} parent=5 // pred_check
        %p78 = pneg %p77
      $region14: #{tpu_custom_call.1} parent=5 // pred_check_branch
        %80 = sbr.rel (%p78) target = $region16
      $region15: #{tpu_custom_call.1} parent=5 // pred_region
        // Predicated region
        $region17: #{tpu_custom_call.1} parent=15 // pred_check
          %p81 = pneg %p30
        $region18: #{tpu_custom_call.1} parent=15 // pred_check_branch
          %83 = sbr.rel (%p81) target = $region20
        $region19: #{tpu_custom_call.1} parent=15 // pred_region
          %p84 = scmp.lt.s32.totalorder %s10, 1
          %s85 = scalar_select %p84, %s10, 1
          %s86 = smul.addr %s85, 3
          %s87 = smul.addr %s86, 8
          %s88 = scalar_lea.vmem %s0, %s87
        $region20: #{tpu_custom_call.1} parent=15 // pred_fallthru
          _
      $region16: #{tpu_custom_call.1} parent=5 // pred_fallthru
        _
      %p89 = scmp.le.s32.totalorder 1, %s10
      %p90 = scmp.lt.s32.totalorder %s10, 3
      %p91 = pnand %p89, %p90
      %p92 = pneg %p91
      // Predicated region
      $region21: #{tpu_custom_call.1} parent=5 // pred_check
        _
      $region22: #{tpu_custom_call.1} parent=5 // pred_check_branch
        %94 = sbr.rel (%p91) target = $region24
      $region23: #{tpu_custom_call.1} parent=5 // pred_region
        %s95 = ssub.s32 %s10, 1
        %p96 = scmp.lt.s32.totalorder %s15, 1
        %s97 = scalar_select %p96, %s15, 1
        %s98 = smul.addr %s97, 3
        %s99 = smul.addr %s98, 8
        %s100 = scalar_lea.vmem %s0, %s99
        %p101 = pneg %p36
        %p102 = pneg %p33
        %p103 = pneg %p62
        %p104 = pneg %p59
        %s105 = sand.u32 %s49, 1
        %s106 = scalar_lea.sflag [#allocation3], %s105
        %s107 = sand.u32 %s49, 1
        %s108 = smul.addr %s107, 32
        %s109 = scalar_lea.vmem [#allocation2], %s108
        %p110 = scmp.lt.s32.totalorder %s15, 1
        %s111 = scalar_select %p110, %s15, 1
        %s112 = smul.addr %s111, 3
        %s113 = smul.addr %s112, 8
        %s114 = scalar_lea.vmem %s0, %s113
        %v115 = vld [vmem:[%s114] sm:$0xff]
        %v116 = vld [vmem:[%s114 + $0x8] sm:$0xff]
        %v117 = vld [vmem:[%s114 + $0x10] sm:$0x3]
        %120 = vrot.lane.b32.xlu0 %v115, 126
        %v121 = vpop.permute.xlu0 %120
        %122 = vrot.lane.b32.xlu0 %v116, 126
        %v123 = vpop.permute.xlu0 %122
        %v126 = vsub.f32 %v115, %v121
        %v127 = vsub.f32 %v116, %v123
        %129 = vrot.lane.b32.xlu0 %v117, 126
        %v130 = vpop.permute.xlu0 %129
        %v132 = vsub.f32 %v117, %v130
        %v133 = vmul.f32 %v126, 2.0
        %v134 = vmul.f32 %v127, 2.0
        %v135 = vmul.f32 %v132, 2.0
        %vm139 = vcmask 1046528
        %v140 = vrot.slane %v133, 1
        %v141 = vrot.slane %v134, 1
        %v142 = vsel %vm139, %v140, %v141
        %v143 = vrot.slane %v135, 1
        %v144 = vsel %vm139, %v141, %v143
        %v147 = vadd.f32 %v126, %v142
        %v148 = vadd.f32 %v127, %v144
        %vm152 = vcmask 1045504
        %v153 = vrot.slane %v126, 2
        %v154 = vrot.slane %v127, 2
        %v155 = vsel %vm152, %v153, %v154
        %v156 = vrot.slane %v132, 2
        %v157 = vsel %vm152, %v154, %v156
        %v160 = vadd.f32 %v147, %v155
        %v161 = vadd.f32 %v148, %v157
        %v162 = vadd.f32 %v115, %v121
        %v163 = vadd.f32 %v116, %v123
        %v164 = vadd.f32 %v117, %v130
        %v168 = vrot.slane %v162, 2
        %v169 = vrot.slane %v163, 2
        %v170 = vsel %vm152, %v168, %v169
        %v171 = vrot.slane %v164, 2
        %v172 = vsel %vm152, %v169, %v171
        %v175 = vsub.f32 %v162, %v170
        %v176 = vsub.f32 %v163, %v172
        %v177 = vrot.slane %v115, 2
        %v178 = vrot.slane %v116, 2
        %v179 = vsel %vm152, %v177, %v178
        %v180 = vrot.slane %v117, 2
        %v181 = vsel %vm152, %v178, %v180
        %v184 = vsub.f32 %v115, %v179
        %v185 = vsub.f32 %v116, %v181
        %v186 = vmul.f32 %v184, 2.0
        %v187 = vmul.f32 %v185, 2.0
        %190 = vrot.lane.b32.xlu0 %v186, 127
        %v191 = vpop.permute.xlu0 %190
        %192 = vrot.lane.b32.xlu0 %v187, 127
        %v193 = vpop.permute.xlu0 %192
        %v196 = vadd.f32 %v175, %v191
        %v197 = vadd.f32 %v176, %v193
        %vm198 = vcmask 130048
        %199 = vst.msk [vmem:[%s109] sm:$0xff] %vm198, %v196
        %200 = vst.msk [vmem:[%s109 + $0x8] sm:$0xff] %vm198, %v197
        %s201 = scalar_lea.vmem %s109, 16 [#allocation2]
        %202 = vst.msk [vmem:[%s201] sm:$0xff] %vm198, %v160
        %203 = vst.msk [vmem:[%s201 + $0x8] sm:$0xff] %vm198, %v161
        %s204 = sand.u32 %s49, 1
        %s205 = scalar_lea.sflag [#allocation3], %s204
        %s206 = sand.u32 %s49, 1
        %s207 = smul.addr %s206, 32
        %s208 = scalar_lea.vmem [#allocation2], %s207
        // Predicated region
        $region25: #{tpu_custom_call.1} parent=23 // pred_check
          %p209 = pneg %p59
        $region26: #{tpu_custom_call.1} parent=23 // pred_check_branch
          %211 = sbr.rel (%p209) target = $region28
        $region27: #{tpu_custom_call.1} parent=23 // pred_region
          %213 = vsyncadd %s205, 0
          %s214 = smul.addr %s15, 4
          %s215 = smul.addr %s214, 8
          %s216 = scalar_lea.hbm %s1, %s215
          %s217 = sshll.u32 %s208, 4
          %s218 = int_to_ptr.vmem [resolvable:$true] %s217
          %s219 = sshll.u32 %s216, 4
          %s220 = int_to_ptr.hbm [resolvable:$true] %s219
          %225 = dma.vmem_to_hbm [thread:$0]  %s218, 512, %s220, %s205, 128, 128, 8
        $region28: #{tpu_custom_call.1} parent=23 // pred_fallthru
          _
      $region24: #{tpu_custom_call.1} parent=5 // pred_fallthru
        _
      %p226 = scmp.le.s32.totalorder 2, %s10
      // Predicated region
      $region29: #{tpu_custom_call.1} parent=5 // pred_check
        %p227 = pneg %p226
      $region30: #{tpu_custom_call.1} parent=5 // pred_check_branch
        %229 = sbr.rel (%p227) target = $region32
      $region31: #{tpu_custom_call.1} parent=5 // pred_region
        %s230 = ssub.s32 %s10, 2
        // Predicated region
        $region33: #{tpu_custom_call.1} parent=31 // pred_check
          %p231 = pneg %p65
        $region34: #{tpu_custom_call.1} parent=31 // pred_check_branch
          %233 = sbr.rel (%p231) target = $region36
        $region35: #{tpu_custom_call.1} parent=31 // pred_region
          %s234 = sand.u32 %s50, 1
          %s235 = scalar_lea.sflag [#allocation3], %s234
          %s236 = sand.u32 %s50, 1
          %s237 = smul.addr %s236, 32
          %s238 = scalar_lea.vmem [#allocation2], %s237
          %240 = dma.done %s235, 512
        $region36: #{tpu_custom_call.1} parent=31 // pred_fallthru
          _
      $region32: #{tpu_custom_call.1} parent=5 // pred_fallthru
        _
    $region6: #{tpu_custom_call.1} parent=1 // loop_footer
      %s14 = sadd.s32 1, %s10
    $region7: #{tpu_custom_call.1} parent=1 // loop_footer_branch
      %9 = sbr.rel target = $region3
    $region8: #{tpu_custom_call.1} parent=1 // loop_exit
      _
    %241 = vsyncpa [#allocation3], 1
    %s242 = scalar_lea.sflag [#allocation3], 1
    %243 = vsyncpa %s242, 1

</llo_original>
